<compile_context>
chip_gen: v5e
topology: v5e:2x2
jax: 0.10.0
libtpu: 0.0.40
codegen_flags: <defaults>
</compile_context>

<pallas_src>
import jax
import jax.numpy as jnp
from jax.experimental import pallas as pl
from jax.experimental.pallas import tpu as pltpu

LABEL_SMOOTH_EPS = 0.1


def _visual_head_kernel(x_ref, w_ref, b_ref, labels_ref, loss_ref):
    # x_ref:      (TB, D)  bfloat16
    # w_ref:      (C, D)   bfloat16   (nn.Linear weight layout, NOT transposed)
    # b_ref:      (1, C)   float32
    # labels_ref: (TB, 1)  int32
    # loss_ref:   (TB, 1)  float32    per-sample label-smoothed CE
    x = x_ref[...]
    w = w_ref[...]
    b = b_ref[...]
    labels = labels_ref[...]

    # Hot path 1: Linear layer as a trans-B matmul on the MXU, f32 accumulation.
    logits = jax.lax.dot_general(
        x, w,
        dimension_numbers=(((1,), (1,)), ((), ())),
        preferred_element_type=jnp.float32,
    ) + b                                                                # (TB, C) f32

    # Hot path 2: label-smoothed cross entropy (stable log-sum-exp form), f32.
    m = jnp.max(logits, axis=-1, keepdims=True)                          # (TB, 1)
    lse = m + jnp.log(jnp.sum(jnp.exp(logits - m), axis=-1, keepdims=True))

    col_ids = jax.lax.broadcasted_iota(jnp.int32, logits.shape, 1)       # (TB, C)
    gold = jnp.sum(jnp.where(col_ids == labels, logits, 0.0),
                   axis=-1, keepdims=True)                               # (TB, 1)
    sum_logits = jnp.sum(logits, axis=-1, keepdims=True)                 # (TB, 1)

    num_class = logits.shape[-1]
    eps = LABEL_SMOOTH_EPS
    loss_ref[...] = lse - (1.0 - eps) * gold - (eps / num_class) * sum_logits


def visual_head_forward(x, labels, w_gloss, b_gloss, *, tile_b=128):
    """x: (B, D) float, labels: (B,) int. Returns scalar mean label-smoothed CE loss."""
    B, D = x.shape
    C = w_gloss.shape[0]                      # nn.Linear weight is (num_class, input_size)

    # Adapt the batch tile: at least the sublane multiple (8), at most `tile_b`,
    # so small batches don't pad all the way to 128.
    b_round8 = ((B + 7) // 8) * 8
    tile_b = max(8, min(tile_b, b_round8))

    # Pad the batch up to a multiple of tile_b (pad rows are sliced away before the mean).
    n_tiles = pl.cdiv(B, tile_b)
    Bp = n_tiles * tile_b
    pad = Bp - B
    if pad:
        x = jnp.pad(x, ((0, pad), (0, 0)))
        labels = jnp.pad(labels, (0, pad))

    x_bf = x.astype(jnp.bfloat16)             # (Bp, D)
    w_bf = w_gloss.astype(jnp.bfloat16)       # (C, D)  — no transpose
    b2d = b_gloss.reshape(1, C).astype(jnp.float32)
    labels2d = labels.reshape(Bp, 1).astype(jnp.int32)

    per_sample = pl.pallas_call(
        _visual_head_kernel,
        out_shape=jax.ShapeDtypeStruct((Bp, 1), jnp.float32),
        grid_spec=pltpu.PrefetchScalarGridSpec(
            num_scalar_prefetch=0,
            grid=(n_tiles,),
            in_specs=[
                pl.BlockSpec((tile_b, D), lambda i: (i, 0)),   # x tile
                pl.BlockSpec((C, D), lambda i: (0, 0)),        # full weight, VMEM-resident
                pl.BlockSpec((1, C), lambda i: (0, 0)),        # bias, VMEM-resident
                pl.BlockSpec((tile_b, 1), lambda i: (i, 0)),   # labels tile
            ],
            out_specs=pl.BlockSpec((tile_b, 1), lambda i: (i, 0)),
        ),
        compiler_params=pltpu.CompilerParams(
            dimension_semantics=("parallel",),                 # shards across v7x's 2 TCs
            vmem_limit_bytes=32 << 20,                         # safe on v5e/v6e/v7x
        ),
    )(x_bf, w_bf, b2d, labels2d)

    # Mean over the TRUE batch size (drop padded rows).
    return jnp.mean(per_sample[:B, 0])


def _reference_forward(x, labels, w_gloss, b_gloss):
    # Same bf16-input / f32-accumulate matmul as the kernel, then standard
    # label-smoothing CE (eps=0.1, mean reduction).
    logits = jnp.dot(x.astype(jnp.bfloat16), w_gloss.astype(jnp.bfloat16).T,
                     preferred_element_type=jnp.float32) + b_gloss
    logp = jax.nn.log_softmax(logits, axis=-1)
    C = logits.shape[-1]
    onehot = jax.nn.one_hot(labels, C, dtype=jnp.float32)
    smoothed = (1.0 - LABEL_SMOOTH_EPS) * onehot + LABEL_SMOOTH_EPS / C
    return jnp.mean(-jnp.sum(smoothed * logp, axis=-1))


if __name__ == "__main__":
    # Small shapes consistent with the module: input_size=256 (module default),
    # a modest gloss vocabulary, and a ragged batch to exercise padding.
    B, INPUT_SIZE, NUM_CLASS, WORD_EMB_DIM = 60, 256, 512, 300

    key = jax.random.PRNGKey(0)
    k_x, k_lbl, k_wg, k_bg, k_wm, k_bm = jax.random.split(key, 6)

    x = jax.random.normal(k_x, (B, INPUT_SIZE), dtype=jnp.float32)
    labels = jax.random.randint(k_lbl, (B,), 0, NUM_CLASS, dtype=jnp.int32)

    # gloss_output_layer: nn.Linear(input_size, num_class) -> weight (C, D), bias (C,)
    w_gloss = jax.random.normal(k_wg, (NUM_CLASS, INPUT_SIZE), dtype=jnp.float32) * 0.02
    b_gloss = jax.random.normal(k_bg, (NUM_CLASS,), dtype=jnp.float32) * 0.02

    # word_emb_mapper: nn.Linear(300, input_size) — present in the module, unused in forward.
    w_map = jax.random.normal(k_wm, (INPUT_SIZE, WORD_EMB_DIM), dtype=jnp.float32) * 0.02
    b_map = jax.random.normal(k_bm, (INPUT_SIZE,), dtype=jnp.float32) * 0.02
    del w_map, b_map

    loss = visual_head_forward(x, labels, w_gloss, b_gloss)
    loss = jax.block_until_ready(loss)

    ref = _reference_forward(x, labels, w_gloss, b_gloss)
    assert jnp.allclose(loss, ref, rtol=1e-4, atol=1e-4), (loss, ref)

    print("KERNEL_OK")
</pallas_src>

<mosaic_0001>
module attributes {stable_mosaic.version = 11 : i64} {
  func.func @_visual_head_kernel(%arg0: i32, %arg1: memref<64x256xbf16, #tpu.memory_space<vmem>>, %arg2: memref<512x256xbf16, #tpu.memory_space<vmem>>, %arg3: memref<1x512xf32, #tpu.memory_space<vmem>>, %arg4: memref<64x1xi32, #tpu.memory_space<vmem>>, %arg5: memref<64x1xf32, #tpu.memory_space<vmem>>) attributes {dimension_semantics = [#tpu.dimension_semantics<parallel>], iteration_bounds = array<i64: 1>, scalar_prefetch = 0 : i64, scratch_operands = 0 : i64, tpu.core_type = #tpu.core_type<tc>, window_params = [{transform_indices = @transform_0, window_bounds = array<i64: 64, 256>}, {pipeline_mode = #tpu.pipeline_mode<synchronous>, transform_indices = @transform_1, window_bounds = array<i64: 512, 256>}, {pipeline_mode = #tpu.pipeline_mode<synchronous>, transform_indices = @transform_2, window_bounds = array<i64: 1, 512>}, {transform_indices = @transform_3, window_bounds = array<i64: 64, 1>}, {transform_indices = @transform_4, window_bounds = array<i64: 64, 1>}]} {
    %c0 = arith.constant 0 : index
    %c0_0 = arith.constant 0 : index
    %0 = vector.load %arg1[%c0, %c0_0] : memref<64x256xbf16, #tpu.memory_space<vmem>>, vector<64x256xbf16>
    %c0_1 = arith.constant 0 : index
    %c0_2 = arith.constant 0 : index
    %1 = vector.load %arg2[%c0_1, %c0_2] : memref<512x256xbf16, #tpu.memory_space<vmem>>, vector<512x256xbf16>
    %c0_3 = arith.constant 0 : index
    %c0_4 = arith.constant 0 : index
    %2 = vector.load %arg3[%c0_3, %c0_4] : memref<1x512xf32, #tpu.memory_space<vmem>>, vector<1x512xf32>
    %c0_5 = arith.constant 0 : index
    %c0_6 = arith.constant 0 : index
    %3 = vector.load %arg4[%c0_5, %c0_6] : memref<64x1xi32, #tpu.memory_space<vmem>>, vector<64x1xi32>
    %cst = arith.constant dense<0.000000e+00> : vector<64x512xf32>
    %4 = tpu.matmul %0, %1, %cst {dimension_numbers = #tpu.dot_dimension_numbers<[1], [1], [0], [0], [0, 0, 1, 0], [], []>} : vector<64x256xbf16>, vector<512x256xbf16>, vector<64x512xf32> -> vector<64x512xf32>
    %5 = vector.broadcast %2 : vector<1x512xf32> to vector<64x512xf32>
    %6 = arith.addf %4, %5 : vector<64x512xf32>
    %cst_7 = arith.constant dense<0xFF800000> : vector<64xf32>
    %7 = vector.multi_reduction <maximumf>, %6, %cst_7 [1] : vector<64x512xf32> to vector<64xf32>
    %8 = vector.shape_cast %7 : vector<64xf32> to vector<64x1xf32>
    %9 = vector.broadcast %8 : vector<64x1xf32> to vector<64x512xf32>
    %10 = arith.subf %6, %9 : vector<64x512xf32>
    %11 = math.exp %10 : vector<64x512xf32>
    %cst_8 = arith.constant dense<0.000000e+00> : vector<64xf32>
    %12 = vector.multi_reduction <add>, %11, %cst_8 [1] : vector<64x512xf32> to vector<64xf32>
    %13 = vector.shape_cast %12 : vector<64xf32> to vector<64x1xf32>
    %14 = math.log %13 : vector<64x1xf32>
    %15 = arith.addf %8, %14 : vector<64x1xf32>
    %16 = tpu.iota {dimensions = array<i32: 1>} : vector<64x512xi32>
    %17 = vector.broadcast %3 : vector<64x1xi32> to vector<64x512xi32>
    %18 = arith.cmpi eq, %16, %17 : vector<64x512xi32>
    %cst_9 = arith.constant 0.000000e+00 : f32
    %19 = vector.broadcast %cst_9 : f32 to vector<64x512xf32>
    %20 = arith.select %18, %6, %19 : vector<64x512xi1>, vector<64x512xf32>
    %cst_10 = arith.constant dense<0.000000e+00> : vector<64xf32>
    %21 = vector.multi_reduction <add>, %20, %cst_10 [1] : vector<64x512xf32> to vector<64xf32>
    %22 = vector.shape_cast %21 : vector<64xf32> to vector<64x1xf32>
    %cst_11 = arith.constant dense<0.000000e+00> : vector<64xf32>
    %23 = vector.multi_reduction <add>, %6, %cst_11 [1] : vector<64x512xf32> to vector<64xf32>
    %24 = vector.shape_cast %23 : vector<64xf32> to vector<64x1xf32>
    %cst_12 = arith.constant 0.899999976 : f32
    %25 = vector.broadcast %cst_12 : f32 to vector<64x1xf32>
    %26 = arith.mulf %25, %22 : vector<64x1xf32>
    %27 = arith.subf %15, %26 : vector<64x1xf32>
    %cst_13 = arith.constant 1.95312503E-4 : f32
    %28 = vector.broadcast %cst_13 : f32 to vector<64x1xf32>
    %29 = arith.mulf %28, %24 : vector<64x1xf32>
    %30 = arith.subf %27, %29 : vector<64x1xf32>
    %c0_14 = arith.constant 0 : index
    %c0_15 = arith.constant 0 : index
    %31 = vector.load %arg5[%c0_14, %c0_15] : memref<64x1xf32, #tpu.memory_space<vmem>>, vector<64x1xf32>
    tpu.vector_store %arg5[%c0_14, %c0_15], %30 {strides = array<i32>} : memref<64x1xf32, #tpu.memory_space<vmem>>, vector<64x1xf32>,
    return
  }
  func.func @transform_0(%arg0: i32) -> (i32, i32) {
    %c0_i32 = arith.constant 0 : i32
    %c0_i32_0 = arith.constant 0 : i32
    return %arg0, %c0_i32 : i32, i32
  }
  func.func @transform_1(%arg0: i32) -> (i32, i32) {
    %c0_i32 = arith.constant 0 : i32
    %c0_i32_0 = arith.constant 0 : i32
    %c0_i32_1 = arith.constant 0 : i32
    return %c0_i32, %c0_i32_0 : i32, i32
  }
  func.func @transform_2(%arg0: i32) -> (i32, i32) {
    %c0_i32 = arith.constant 0 : i32
    %c0_i32_0 = arith.constant 0 : i32
    %c0_i32_1 = arith.constant 0 : i32
    return %c0_i32, %c0_i32_0 : i32, i32
  }
  func.func @transform_3(%arg0: i32) -> (i32, i32) {
    %c0_i32 = arith.constant 0 : i32
    %c0_i32_0 = arith.constant 0 : i32
    return %arg0, %c0_i32 : i32, i32
  }
  func.func @transform_4(%arg0: i32) -> (i32, i32) {
    %c0_i32 = arith.constant 0 : i32
    %c0_i32_0 = arith.constant 0 : i32
    return %arg0, %c0_i32 : i32, i32
  }
}

</mosaic_0001>

<llo_original>
// kernel: tpu_custom_call.1
$region0: #{tpu_custom_call.1}
  #allocation0 [shape = 'u32[]', space=smem, size = 0x4, offset = 0x4, fixed_abs, tag = 'smem constant byte address 0x4 - core index']
  #allocation1 [shape = 'u32[72,128]{1,0:T(1,128)}', space=vmem, size = 0x9000, scoped, tag = 'internal scratch']
  %s0 = inlined_call_operand.vmem [shape: bf16[64,256], index: 0, kind: input, shape index: {}]
  %s1 = inlined_call_operand.hbm [shape: bf16[512,256], index: 1, kind: input, shape index: {}]
  %s2 = inlined_call_operand.hbm [shape: f32[1,512], index: 2, kind: input, shape index: {}]
  %s3 = inlined_call_operand.vmem [shape: s32[64,1], index: 3, kind: input, shape index: {}]
  %s4 = inlined_call_operand.vmem [shape: f32[64,1], index: 4, kind: output, shape index: {}]
  %s5 = sld [smem:[#allocation0]]
  $region34: #{tpu_custom_call.1} parent=0
    _
  %s7 = ssub.s32 1, %s5
  %s8 = scalar_select 0, %s7, %s5
  $region1: #{tpu_custom_call.1} parent=0
    #allocation2 [shape = 'u8[262144]{0}', space=vmem, size = 0x40000, scoped, tag = 'input window, operand 1, single buffered']
    #allocation3 [shape = 's32[1]{0}', space=sflag, size = 0x4, scoped, tag = 'scoped memory for tpu_custom_call.1']
    #allocation4 [shape = 'u8[2048]{0}', space=vmem, size = 0x800, scoped, tag = 'input window, operand 2, single buffered']
    #allocation5 [shape = 's32[1]{0}', space=sflag, size = 0x4, scoped, tag = 'scoped memory for tpu_custom_call.1']
    %9 = vsyncpa [#allocation3], 0
    %10 = vsyncpa [#allocation5], 0
    // Predicated region
    $region2: #{tpu_custom_call.1} parent=1 // pred_check
      _
    $region3: #{tpu_custom_call.1} parent=1 // pred_check_branch
      %12 = sbr.rel (0) target = $region5
    $region4: #{tpu_custom_call.1} parent=1 // pred_region
      _
    $region5: #{tpu_custom_call.1} parent=1 // pred_fallthru
      _
    // Predicated region
    $region6: #{tpu_custom_call.1} parent=1 // pred_check
      _
    $region7: #{tpu_custom_call.1} parent=1 // pred_check_branch
      %14 = sbr.rel (0) target = $region9
    $region8: #{tpu_custom_call.1} parent=1 // pred_region
      %16 = vsyncadd [#allocation3], 0
      %s17 = sshll.u32 %s1, 4
      %s18 = int_to_ptr.hbm [resolvable:$true] %s17
      %s19 = sshll.u32 [#allocation2], 4
      %s20 = int_to_ptr.vmem [resolvable:$true] %s19
      %25 = dma.hbm_to_vmem [thread:$0]  %s18, 8192, %s20, [#allocation3], 128, 128, 8
    $region9: #{tpu_custom_call.1} parent=1 // pred_fallthru
      _
    // Predicated region
    $region10: #{tpu_custom_call.1} parent=1 // pred_check
      _
    $region11: #{tpu_custom_call.1} parent=1 // pred_check_branch
      %27 = sbr.rel (0) target = $region13
    $region12: #{tpu_custom_call.1} parent=1 // pred_region
      %29 = vsyncadd [#allocation5], 0
      %s31 = sshll.u32 %s2, 4
      %s32 = int_to_ptr.hbm [resolvable:$true] %s31
      %s33 = sshll.u32 [#allocation4], 4
      %s34 = int_to_ptr.vmem [resolvable:$true] %s33
      %36 = dma.hbm_to_vmem [thread:$0]  %s32, 64, %s34, [#allocation5]
    $region13: #{tpu_custom_call.1} parent=1 // pred_fallthru
      _
    // Predicated region
    $region14: #{tpu_custom_call.1} parent=1 // pred_check
      _
    $region15: #{tpu_custom_call.1} parent=1 // pred_check_branch
      %38 = sbr.rel (0) target = $region17
    $region16: #{tpu_custom_call.1} parent=1 // pred_region
      _
    $region17: #{tpu_custom_call.1} parent=1 // pred_fallthru
      _
    // Predicated region
    $region18: #{tpu_custom_call.1} parent=1 // pred_check
      _
    $region19: #{tpu_custom_call.1} parent=1 // pred_check_branch
      %40 = sbr.rel (0) target = $region21
    $region20: #{tpu_custom_call.1} parent=1 // pred_region
      %42 = dma.done [#allocation3], 8192
    $region21: #{tpu_custom_call.1} parent=1 // pred_fallthru
      _
    // Predicated region
    $region22: #{tpu_custom_call.1} parent=1 // pred_check
      _
    $region23: #{tpu_custom_call.1} parent=1 // pred_check_branch
      %44 = sbr.rel (0) target = $region25
    $region24: #{tpu_custom_call.1} parent=1 // pred_region
      %46 = dma.done [#allocation5], 64
    $region25: #{tpu_custom_call.1} parent=1 // pred_fallthru
      _
    %v47 = vld [vmem:[%s0] sm:$0xff]
    %v48 = vld [vmem:[%s0 + $0x8] sm:$0xff]
    %v49 = vld [vmem:[%s0 + $0x10] sm:$0xff]
    %v50 = vld [vmem:[%s0 + $0x18] sm:$0xff]
    %v51 = vld [vmem:[%s0 + $0x20] sm:$0xff]
    %v52 = vld [vmem:[%s0 + $0x28] sm:$0xff]
    %v53 = vld [vmem:[%s0 + $0x30] sm:$0xff]
    %v54 = vld [vmem:[%s0 + $0x38] sm:$0xff]
    %v55 = vld [vmem:[#allocation2] sm:$0xff]
    %v56 = vld [vmem:[#allocation2 + $0x8] sm:$0xff]
    %v57 = vld [vmem:[#allocation2 + $0x10] sm:$0xff]
    %v58 = vld [vmem:[#allocation2 + $0x18] sm:$0xff]
    %v59 = vld [vmem:[#allocation2 + $0x20] sm:$0xff]
    %v60 = vld [vmem:[#allocation2 + $0x28] sm:$0xff]
    %v61 = vld [vmem:[#allocation2 + $0x30] sm:$0xff]
    %v62 = vld [vmem:[#allocation2 + $0x38] sm:$0xff]
    %v63 = vld [vmem:[#allocation2 + $0x40] sm:$0xff]
    %v64 = vld [vmem:[#allocation2 + $0x48] sm:$0xff]
    %v65 = vld [vmem:[#allocation2 + $0x50] sm:$0xff]
    %v66 = vld [vmem:[#allocation2 + $0x58] sm:$0xff]
    %v67 = vld [vmem:[#allocation2 + $0x60] sm:$0xff]
    %v68 = vld [vmem:[#allocation2 + $0x68] sm:$0xff]
    %v69 = vld [vmem:[#allocation2 + $0x70] sm:$0xff]
    %v70 = vld [vmem:[#allocation2 + $0x78] sm:$0xff]
    %v71 = vld [vmem:[#allocation2 + $0x80] sm:$0xff]
    %v72 = vld [vmem:[#allocation2 + $0x88] sm:$0xff]
    %v73 = vld [vmem:[#allocation2 + $0x90] sm:$0xff]
    %v74 = vld [vmem:[#allocation2 + $0x98] sm:$0xff]
    %v75 = vld [vmem:[#allocation2 + $0xa0] sm:$0xff]
    %v76 = vld [vmem:[#allocation2 + $0xa8] sm:$0xff]
    %v77 = vld [vmem:[#allocation2 + $0xb0] sm:$0xff]
    %v78 = vld [vmem:[#allocation2 + $0xb8] sm:$0xff]
    %v79 = vld [vmem:[#allocation2 + $0xc0] sm:$0xff]
    %v80 = vld [vmem:[#allocation2 + $0xc8] sm:$0xff]
    %v81 = vld [vmem:[#allocation2 + $0xd0] sm:$0xff]
    %v82 = vld [vmem:[#allocation2 + $0xd8] sm:$0xff]
    %v83 = vld [vmem:[#allocation2 + $0xe0] sm:$0xff]
    %v84 = vld [vmem:[#allocation2 + $0xe8] sm:$0xff]
    %v85 = vld [vmem:[#allocation2 + $0xf0] sm:$0xff]
    %v86 = vld [vmem:[#allocation2 + $0xf8] sm:$0xff]
    %v87 = vld [vmem:[#allocation2 + $0x100] sm:$0xff]
    %v88 = vld [vmem:[#allocation2 + $0x108] sm:$0xff]
    %v89 = vld [vmem:[#allocation2 + $0x110] sm:$0xff]
    %v90 = vld [vmem:[#allocation2 + $0x118] sm:$0xff]
    %v91 = vld [vmem:[#allocation2 + $0x120] sm:$0xff]
    %v92 = vld [vmem:[#allocation2 + $0x128] sm:$0xff]
    %v93 = vld [vmem:[#allocation2 + $0x130] sm:$0xff]
    %v94 = vld [vmem:[#allocation2 + $0x138] sm:$0xff]
    %v95 = vld [vmem:[#allocation2 + $0x140] sm:$0xff]
    %v96 = vld [vmem:[#allocation2 + $0x148] sm:$0xff]
    %v97 = vld [vmem:[#allocation2 + $0x150] sm:$0xff]
    %v98 = vld [vmem:[#allocation2 + $0x158] sm:$0xff]
    %v99 = vld [vmem:[#allocation2 + $0x160] sm:$0xff]
    %v100 = vld [vmem:[#allocation2 + $0x168] sm:$0xff]
    %v101 = vld [vmem:[#allocation2 + $0x170] sm:$0xff]
    %v102 = vld [vmem:[#allocation2 + $0x178] sm:$0xff]
    %v103 = vld [vmem:[#allocation2 + $0x180] sm:$0xff]
    %v104 = vld [vmem:[#allocation2 + $0x188] sm:$0xff]
    %v105 = vld [vmem:[#allocation2 + $0x190] sm:$0xff]
    %v106 = vld [vmem:[#allocation2 + $0x198] sm:$0xff]
    %v107 = vld [vmem:[#allocation2 + $0x1a0] sm:$0xff]
    %v108 = vld [vmem:[#allocation2 + $0x1a8] sm:$0xff]
    %v109 = vld [vmem:[#allocation2 + $0x1b0] sm:$0xff]
    %v110 = vld [vmem:[#allocation2 + $0x1b8] sm:$0xff]
    %v111 = vld [vmem:[#allocation2 + $0x1c0] sm:$0xff]
    %v112 = vld [vmem:[#allocation2 + $0x1c8] sm:$0xff]
    %v113 = vld [vmem:[#allocation2 + $0x1d0] sm:$0xff]
    %v114 = vld [vmem:[#allocation2 + $0x1d8] sm:$0xff]
    %v115 = vld [vmem:[#allocation2 + $0x1e0] sm:$0xff]
    %v116 = vld [vmem:[#allocation2 + $0x1e8] sm:$0xff]
    %v117 = vld [vmem:[#allocation2 + $0x1f0] sm:$0xff]
    %v118 = vld [vmem:[#allocation2 + $0x1f8] sm:$0xff]
    %v119 = vld [vmem:[#allocation4] sm:$0xf]
    %v120 = vld [vmem:[%s3] sm:$0xff]
    %v121 = vld [vmem:[%s3 + $0x8] sm:$0xff]
    %v122 = vld [vmem:[%s3 + $0x10] sm:$0xff]
    %v123 = vld [vmem:[%s3 + $0x18] sm:$0xff]
    %v124 = vld [vmem:[%s3 + $0x20] sm:$0xff]
    %v125 = vld [vmem:[%s3 + $0x28] sm:$0xff]
    %v126 = vld [vmem:[%s3 + $0x30] sm:$0xff]
    %v127 = vld [vmem:[%s3 + $0x38] sm:$0xff]
    %v129 = vperm.slane %v119, 0
    %v130 = vperm.slane %v119, 1
    %v131 = vperm.slane %v119, 2
    %v132 = vperm.slane %v119, 3
    %v145 = vunpack.c.l.b16 %v47
    %v146 = vunpack.c.h.b16 %v47
    %v147 = vunpack.c.l.b16 %v48
    %v148 = vunpack.c.h.b16 %v48
    %v149 = vunpack.c.l.b16 %v49
    %v150 = vunpack.c.h.b16 %v49
    %v151 = vunpack.c.l.b16 %v50
    %v152 = vunpack.c.h.b16 %v50
    %v153 = vunpack.c.l.b16 %v51
    %v154 = vunpack.c.h.b16 %v51
    %v155 = vunpack.c.l.b16 %v52
    %v156 = vunpack.c.h.b16 %v52
    %v157 = vunpack.c.l.b16 %v53
    %v158 = vunpack.c.h.b16 %v53
    %v159 = vunpack.c.l.b16 %v54
    %v160 = vunpack.c.h.b16 %v54
    %v161 = vpack.c.b16 %v147, %v145
    %v162 = vpack.c.b16 %v148, %v146
    %v163 = vpack.c.b16 %v151, %v149
    %v164 = vpack.c.b16 %v152, %v150
    %v165 = vpack.c.b16 %v155, %v153
    %v166 = vpack.c.b16 %v156, %v154
    %v167 = vpack.c.b16 %v159, %v157
    %v168 = vpack.c.b16 %v160, %v158
    %v241 = vunpack.c.l.b16 %v55
    %v242 = vunpack.c.h.b16 %v55
    %v243 = vunpack.c.l.b16 %v56
    %v244 = vunpack.c.h.b16 %v56
    %v245 = vunpack.c.l.b16 %v57
    %v246 = vunpack.c.h.b16 %v57
    %v247 = vunpack.c.l.b16 %v58
    %v248 = vunpack.c.h.b16 %v58
    %v249 = vunpack.c.l.b16 %v59
    %v250 = vunpack.c.h.b16 %v59
    %v251 = vunpack.c.l.b16 %v60
    %v252 = vunpack.c.h.b16 %v60
    %v253 = vunpack.c.l.b16 %v61
    %v254 = vunpack.c.h.b16 %v61
    %v255 = vunpack.c.l.b16 %v62
    %v256 = vunpack.c.h.b16 %v62
    %v257 = vunpack.c.l.b16 %v63
    %v258 = vunpack.c.h.b16 %v63
    %v259 = vunpack.c.l.b16 %v64
    %v260 = vunpack.c.h.b16 %v64
    %v261 = vunpack.c.l.b16 %v65
    %v262 = vunpack.c.h.b16 %v65
    %v263 = vunpack.c.l.b16 %v66
    %v264 = vunpack.c.h.b16 %v66
    %v265 = vunpack.c.l.b16 %v67
    %v266 = vunpack.c.h.b16 %v67
    %v267 = vunpack.c.l.b16 %v68
    %v268 = vunpack.c.h.b16 %v68
    %v269 = vunpack.c.l.b16 %v69
    %v270 = vunpack.c.h.b16 %v69
    %v271 = vunpack.c.l.b16 %v70
    %v272 = vunpack.c.h.b16 %v70
    %v273 = vunpack.c.l.b16 %v71
    %v274 = vunpack.c.h.b16 %v71
    %v275 = vunpack.c.l.b16 %v72
    %v276 = vunpack.c.h.b16 %v72
    %v277 = vunpack.c.l.b16 %v73
    %v278 = vunpack.c.h.b16 %v73
    %v279 = vunpack.c.l.b16 %v74
    %v280 = vunpack.c.h.b16 %v74
    %v281 = vunpack.c.l.b16 %v75
    %v282 = vunpack.c.h.b16 %v75
    %v283 = vunpack.c.l.b16 %v76
    %v284 = vunpack.c.h.b16 %v76
    %v285 = vunpack.c.l.b16 %v77
    %v286 = vunpack.c.h.b16 %v77
    %v287 = vunpack.c.l.b16 %v78
    %v288 = vunpack.c.h.b16 %v78
    %v289 = vunpack.c.l.b16 %v79
    %v290 = vunpack.c.h.b16 %v79
    %v291 = vunpack.c.l.b16 %v80
    %v292 = vunpack.c.h.b16 %v80
    %v293 = vunpack.c.l.b16 %v81
    %v294 = vunpack.c.h.b16 %v81
    %v295 = vunpack.c.l.b16 %v82
    %v296 = vunpack.c.h.b16 %v82
    %v297 = vunpack.c.l.b16 %v83
    %v298 = vunpack.c.h.b16 %v83
    %v299 = vunpack.c.l.b16 %v84
    %v300 = vunpack.c.h.b16 %v84
    %v301 = vunpack.c.l.b16 %v85
    %v302 = vunpack.c.h.b16 %v85
    %v303 = vunpack.c.l.b16 %v86
    %v304 = vunpack.c.h.b16 %v86
    %v305 = vunpack.c.l.b16 %v87
    %v306 = vunpack.c.h.b16 %v87
    %v307 = vunpack.c.l.b16 %v88
    %v308 = vunpack.c.h.b16 %v88
    %v309 = vunpack.c.l.b16 %v89
    %v310 = vunpack.c.h.b16 %v89
    %v311 = vunpack.c.l.b16 %v90
    %v312 = vunpack.c.h.b16 %v90
    %v313 = vunpack.c.l.b16 %v91
    %v314 = vunpack.c.h.b16 %v91
    %v315 = vunpack.c.l.b16 %v92
    %v316 = vunpack.c.h.b16 %v92
    %v317 = vunpack.c.l.b16 %v93
    %v318 = vunpack.c.h.b16 %v93
    %v319 = vunpack.c.l.b16 %v94
    %v320 = vunpack.c.h.b16 %v94
    %v321 = vunpack.c.l.b16 %v95
    %v322 = vunpack.c.h.b16 %v95
    %v323 = vunpack.c.l.b16 %v96
    %v324 = vunpack.c.h.b16 %v96
    %v325 = vunpack.c.l.b16 %v97
    %v326 = vunpack.c.h.b16 %v97
    %v327 = vunpack.c.l.b16 %v98
    %v328 = vunpack.c.h.b16 %v98
    %v329 = vunpack.c.l.b16 %v99
    %v330 = vunpack.c.h.b16 %v99
    %v331 = vunpack.c.l.b16 %v100
    %v332 = vunpack.c.h.b16 %v100
    %v333 = vunpack.c.l.b16 %v101
    %v334 = vunpack.c.h.b16 %v101
    %v335 = vunpack.c.l.b16 %v102
    %v336 = vunpack.c.h.b16 %v102
    %v337 = vunpack.c.l.b16 %v103
    %v338 = vunpack.c.h.b16 %v103
    %v339 = vunpack.c.l.b16 %v104
    %v340 = vunpack.c.h.b16 %v104
    %v341 = vunpack.c.l.b16 %v105
    %v342 = vunpack.c.h.b16 %v105
    %v343 = vunpack.c.l.b16 %v106
    %v344 = vunpack.c.h.b16 %v106
    %v345 = vunpack.c.l.b16 %v107
    %v346 = vunpack.c.h.b16 %v107
    %v347 = vunpack.c.l.b16 %v108
    %v348 = vunpack.c.h.b16 %v108
    %v349 = vunpack.c.l.b16 %v109
    %v350 = vunpack.c.h.b16 %v109
    %v351 = vunpack.c.l.b16 %v110
    %v352 = vunpack.c.h.b16 %v110
    %v353 = vunpack.c.l.b16 %v111
    %v354 = vunpack.c.h.b16 %v111
    %v355 = vunpack.c.l.b16 %v112
    %v356 = vunpack.c.h.b16 %v112
    %v357 = vunpack.c.l.b16 %v113
    %v358 = vunpack.c.h.b16 %v113
    %v359 = vunpack.c.l.b16 %v114
    %v360 = vunpack.c.h.b16 %v114
    %v361 = vunpack.c.l.b16 %v115
    %v362 = vunpack.c.h.b16 %v115
    %v363 = vunpack.c.l.b16 %v116
    %v364 = vunpack.c.h.b16 %v116
    %v365 = vunpack.c.l.b16 %v117
    %v366 = vunpack.c.h.b16 %v117
    %v367 = vunpack.c.l.b16 %v118
    %v368 = vunpack.c.h.b16 %v118
    %v369 = vpack.c.b16 %v243, %v241
    %v370 = vpack.c.b16 %v244, %v242
    %v371 = vpack.c.b16 %v247, %v245
    %v372 = vpack.c.b16 %v248, %v246
    %v373 = vpack.c.b16 %v251, %v249
    %v374 = vpack.c.b16 %v252, %v250
    %v375 = vpack.c.b16 %v255, %v253
    %v376 = vpack.c.b16 %v256, %v254
    %v377 = vpack.c.b16 %v259, %v257
    %v378 = vpack.c.b16 %v260, %v258
    %v379 = vpack.c.b16 %v263, %v261
    %v380 = vpack.c.b16 %v264, %v262
    %v381 = vpack.c.b16 %v267, %v265
    %v382 = vpack.c.b16 %v268, %v266
    %v383 = vpack.c.b16 %v271, %v269
    %v384 = vpack.c.b16 %v272, %v270
    %v385 = vpack.c.b16 %v275, %v273
    %v386 = vpack.c.b16 %v276, %v274
    %v387 = vpack.c.b16 %v279, %v277
    %v388 = vpack.c.b16 %v280, %v278
    %v389 = vpack.c.b16 %v283, %v281
    %v390 = vpack.c.b16 %v284, %v282
    %v391 = vpack.c.b16 %v287, %v285
    %v392 = vpack.c.b16 %v288, %v286
    %v393 = vpack.c.b16 %v291, %v289
    %v394 = vpack.c.b16 %v292, %v290
    %v395 = vpack.c.b16 %v295, %v293
    %v396 = vpack.c.b16 %v296, %v294
    %v397 = vpack.c.b16 %v299, %v297
    %v398 = vpack.c.b16 %v300, %v298
    %v399 = vpack.c.b16 %v303, %v301
    %v400 = vpack.c.b16 %v304, %v302
    %v401 = vpack.c.b16 %v307, %v305
    %v402 = vpack.c.b16 %v308, %v306
    %v403 = vpack.c.b16 %v311, %v309
    %v404 = vpack.c.b16 %v312, %v310
    %v405 = vpack.c.b16 %v315, %v313
    %v406 = vpack.c.b16 %v316, %v314
    %v407 = vpack.c.b16 %v319, %v317
    %v408 = vpack.c.b16 %v320, %v318
    %v409 = vpack.c.b16 %v323, %v321
    %v410 = vpack.c.b16 %v324, %v322
    %v411 = vpack.c.b16 %v327, %v325
    %v412 = vpack.c.b16 %v328, %v326
    %v413 = vpack.c.b16 %v331, %v329
    %v414 = vpack.c.b16 %v332, %v330
    %v415 = vpack.c.b16 %v335, %v333
    %v416 = vpack.c.b16 %v336, %v334
    %v417 = vpack.c.b16 %v339, %v337
    %v418 = vpack.c.b16 %v340, %v338
    %v419 = vpack.c.b16 %v343, %v341
    %v420 = vpack.c.b16 %v344, %v342
    %v421 = vpack.c.b16 %v347, %v345
    %v422 = vpack.c.b16 %v348, %v346
    %v423 = vpack.c.b16 %v351, %v349
    %v424 = vpack.c.b16 %v352, %v350
    %v425 = vpack.c.b16 %v355, %v353
    %v426 = vpack.c.b16 %v356, %v354
    %v427 = vpack.c.b16 %v359, %v357
    %v428 = vpack.c.b16 %v360, %v358
    %v429 = vpack.c.b16 %v363, %v361
    %v430 = vpack.c.b16 %v364, %v362
    %v431 = vpack.c.b16 %v367, %v365
    %v432 = vpack.c.b16 %v368, %v366
    %497 = vmatpush.bf16.xpose.msra.mxu0 %v383
    %498 = vmatpush.bf16.xpose.msra.mxu0 %v381
    %499 = vmatpush.bf16.xpose.msra.mxu0 %v379
    %500 = vmatpush.bf16.xpose.msra.mxu0 %v377
    %501 = vmatpush.bf16.xpose.msra.mxu0 %v375
    %502 = vmatpush.bf16.xpose.msra.mxu0 %v373
    %503 = vmatpush.bf16.xpose.msra.mxu0 %v371
    %504 = vmatpush.bf16.xpose.msra.mxu0 %v369
    %505 = vmatmul.bf16.gmra.mxu0 %v161
    %v506 = vpop.f32.mrf.mxu0
    %v507 = vadd.f32 %v129, %v506
    %v508 = vpop.f32.mrf.mxu0
    %v509 = vadd.f32 %v129, %v508
    %510 = vmatmul.bf16.gmra.mxu0 %v163
    %v511 = vpop.f32.mrf.mxu0
    %v512 = vadd.f32 %v129, %v511
    %v513 = vpop.f32.mrf.mxu0
    %v514 = vadd.f32 %v129, %v513
    %515 = vmatmul.bf16.gmra.mxu0 %v165
    %v516 = vpop.f32.mrf.mxu0
    %v517 = vadd.f32 %v129, %v516
    %v518 = vpop.f32.mrf.mxu0
    %v519 = vadd.f32 %v129, %v518
    %520 = vmatmul.bf16.gmra.mxu0 %v167
    %v521 = vpop.f32.mrf.mxu0
    %v522 = vadd.f32 %v129, %v521
    %v523 = vpop.f32.mrf.mxu0
    %v524 = vadd.f32 %v129, %v523
    %525 = vdwg.mxu0
    %526 = vmatpush.bf16.xpose.msra.mxu0 %v384
    %527 = vmatpush.bf16.xpose.msra.mxu0 %v382
    %528 = vmatpush.bf16.xpose.msra.mxu0 %v380
    %529 = vmatpush.bf16.xpose.msra.mxu0 %v378
    %530 = vmatpush.bf16.xpose.msra.mxu0 %v376
    %531 = vmatpush.bf16.xpose.msra.mxu0 %v374
    %532 = vmatpush.bf16.xpose.msra.mxu0 %v372
    %533 = vmatpush.bf16.xpose.msra.mxu0 %v370
    %534 = vmatmul.bf16.gmra.mxu0 %v162
    %v535 = vpop.f32.mrf.mxu0
    %v536 = vadd.f32 %v507, %v535
    %v537 = vpop.f32.mrf.mxu0
    %v538 = vadd.f32 %v509, %v537
    %539 = vmatmul.bf16.gmra.mxu0 %v164
    %v540 = vpop.f32.mrf.mxu0
    %v541 = vadd.f32 %v512, %v540
    %v542 = vpop.f32.mrf.mxu0
    %v543 = vadd.f32 %v514, %v542
    %544 = vmatmul.bf16.gmra.mxu0 %v166
    %v545 = vpop.f32.mrf.mxu0
    %v546 = vadd.f32 %v517, %v545
    %v547 = vpop.f32.mrf.mxu0
    %v548 = vadd.f32 %v519, %v547
    %549 = vmatmul.bf16.gmra.mxu0 %v168
    %v550 = vpop.f32.mrf.mxu0
    %v551 = vadd.f32 %v522, %v550
    %v552 = vpop.f32.mrf.mxu0
    %v553 = vadd.f32 %v524, %v552
    %554 = vdwg.mxu0
    %555 = vmatpush.bf16.xpose.msra.mxu0 %v399
    %556 = vmatpush.bf16.xpose.msra.mxu0 %v397
    %557 = vmatpush.bf16.xpose.msra.mxu0 %v395
    %558 = vmatpush.bf16.xpose.msra.mxu0 %v393
    %559 = vmatpush.bf16.xpose.msra.mxu0 %v391
    %560 = vmatpush.bf16.xpose.msra.mxu0 %v389
    %561 = vmatpush.bf16.xpose.msra.mxu0 %v387
    %562 = vmatpush.bf16.xpose.msra.mxu0 %v385
    %563 = vmatmul.bf16.gmra.mxu0 %v161
    %v564 = vpop.f32.mrf.mxu0
    %v565 = vadd.f32 %v130, %v564
    %v566 = vpop.f32.mrf.mxu0
    %v567 = vadd.f32 %v130, %v566
    %568 = vmatmul.bf16.gmra.mxu0 %v163
    %v569 = vpop.f32.mrf.mxu0
    %v570 = vadd.f32 %v130, %v569
    %v571 = vpop.f32.mrf.mxu0
    %v572 = vadd.f32 %v130, %v571
    %573 = vmatmul.bf16.gmra.mxu0 %v165
    %v574 = vpop.f32.mrf.mxu0
    %v575 = vadd.f32 %v130, %v574
    %v576 = vpop.f32.mrf.mxu0
    %v577 = vadd.f32 %v130, %v576
    %578 = vmatmul.bf16.gmra.mxu0 %v167
    %v579 = vpop.f32.mrf.mxu0
    %v580 = vadd.f32 %v130, %v579
    %v581 = vpop.f32.mrf.mxu0
    %v582 = vadd.f32 %v130, %v581
    %583 = vdwg.mxu0
    %584 = vmatpush.bf16.xpose.msra.mxu0 %v400
    %585 = vmatpush.bf16.xpose.msra.mxu0 %v398
    %586 = vmatpush.bf16.xpose.msra.mxu0 %v396
    %587 = vmatpush.bf16.xpose.msra.mxu0 %v394
    %588 = vmatpush.bf16.xpose.msra.mxu0 %v392
    %589 = vmatpush.bf16.xpose.msra.mxu0 %v390
    %590 = vmatpush.bf16.xpose.msra.mxu0 %v388
    %591 = vmatpush.bf16.xpose.msra.mxu0 %v386
    %592 = vmatmul.bf16.gmra.mxu0 %v162
    %v593 = vpop.f32.mrf.mxu0
    %v594 = vadd.f32 %v565, %v593
    %v595 = vpop.f32.mrf.mxu0
    %v596 = vadd.f32 %v567, %v595
    %597 = vmatmul.bf16.gmra.mxu0 %v164
    %v598 = vpop.f32.mrf.mxu0
    %v599 = vadd.f32 %v570, %v598
    %v600 = vpop.f32.mrf.mxu0
    %v601 = vadd.f32 %v572, %v600
    %602 = vmatmul.bf16.gmra.mxu0 %v166
    %v603 = vpop.f32.mrf.mxu0
    %v604 = vadd.f32 %v575, %v603
    %v605 = vpop.f32.mrf.mxu0
    %v606 = vadd.f32 %v577, %v605
    %607 = vmatmul.bf16.gmra.mxu0 %v168
    %v608 = vpop.f32.mrf.mxu0
    %v609 = vadd.f32 %v580, %v608
    %v610 = vpop.f32.mrf.mxu0
    %v611 = vadd.f32 %v582, %v610
    %612 = vdwg.mxu0
    %613 = vmatpush.bf16.xpose.msra.mxu0 %v415
    %614 = vmatpush.bf16.xpose.msra.mxu0 %v413
    %615 = vmatpush.bf16.xpose.msra.mxu0 %v411
    %616 = vmatpush.bf16.xpose.msra.mxu0 %v409
    %617 = vmatpush.bf16.xpose.msra.mxu0 %v407
    %618 = vmatpush.bf16.xpose.msra.mxu0 %v405
    %619 = vmatpush.bf16.xpose.msra.mxu0 %v403
    %620 = vmatpush.bf16.xpose.msra.mxu0 %v401
    %621 = vmatmul.bf16.gmra.mxu0 %v161
    %v622 = vpop.f32.mrf.mxu0
    %v623 = vadd.f32 %v131, %v622
    %v624 = vpop.f32.mrf.mxu0
    %v625 = vadd.f32 %v131, %v624
    %626 = vmatmul.bf16.gmra.mxu0 %v163
    %v627 = vpop.f32.mrf.mxu0
    %v628 = vadd.f32 %v131, %v627
    %v629 = vpop.f32.mrf.mxu0
    %v630 = vadd.f32 %v131, %v629
    %631 = vmatmul.bf16.gmra.mxu0 %v165
    %v632 = vpop.f32.mrf.mxu0
    %v633 = vadd.f32 %v131, %v632
    %v634 = vpop.f32.mrf.mxu0
    %v635 = vadd.f32 %v131, %v634
    %636 = vmatmul.bf16.gmra.mxu0 %v167
    %v637 = vpop.f32.mrf.mxu0
    %v638 = vadd.f32 %v131, %v637
    %v639 = vpop.f32.mrf.mxu0
    %v640 = vadd.f32 %v131, %v639
    %641 = vdwg.mxu0
    %642 = vmatpush.bf16.xpose.msra.mxu0 %v416
    %643 = vmatpush.bf16.xpose.msra.mxu0 %v414
    %644 = vmatpush.bf16.xpose.msra.mxu0 %v412
    %645 = vmatpush.bf16.xpose.msra.mxu0 %v410
    %646 = vmatpush.bf16.xpose.msra.mxu0 %v408
    %647 = vmatpush.bf16.xpose.msra.mxu0 %v406
    %648 = vmatpush.bf16.xpose.msra.mxu0 %v404
    %649 = vmatpush.bf16.xpose.msra.mxu0 %v402
    %650 = vmatmul.bf16.gmra.mxu0 %v162
    %v651 = vpop.f32.mrf.mxu0
    %v652 = vadd.f32 %v623, %v651
    %v653 = vpop.f32.mrf.mxu0
    %v654 = vadd.f32 %v625, %v653
    %655 = vmatmul.bf16.gmra.mxu0 %v164
    %v656 = vpop.f32.mrf.mxu0
    %v657 = vadd.f32 %v628, %v656
    %v658 = vpop.f32.mrf.mxu0
    %v659 = vadd.f32 %v630, %v658
    %660 = vmatmul.bf16.gmra.mxu0 %v166
    %v661 = vpop.f32.mrf.mxu0
    %v662 = vadd.f32 %v633, %v661
    %v663 = vpop.f32.mrf.mxu0
    %v664 = vadd.f32 %v635, %v663
    %665 = vmatmul.bf16.gmra.mxu0 %v168
    %v666 = vpop.f32.mrf.mxu0
    %v667 = vadd.f32 %v638, %v666
    %v668 = vpop.f32.mrf.mxu0
    %v669 = vadd.f32 %v640, %v668
    %670 = vdwg.mxu0
    %671 = vmatpush.bf16.xpose.msra.mxu0 %v431
    %672 = vmatpush.bf16.xpose.msra.mxu0 %v429
    %673 = vmatpush.bf16.xpose.msra.mxu0 %v427
    %674 = vmatpush.bf16.xpose.msra.mxu0 %v425
    %675 = vmatpush.bf16.xpose.msra.mxu0 %v423
    %676 = vmatpush.bf16.xpose.msra.mxu0 %v421
    %677 = vmatpush.bf16.xpose.msra.mxu0 %v419
    %678 = vmatpush.bf16.xpose.msra.mxu0 %v417
    %679 = vmatmul.bf16.gmra.mxu0 %v161
    %v680 = vpop.f32.mrf.mxu0
    %v681 = vadd.f32 %v132, %v680
    %v682 = vpop.f32.mrf.mxu0
    %v683 = vadd.f32 %v132, %v682
    %684 = vmatmul.bf16.gmra.mxu0 %v163
    %v685 = vpop.f32.mrf.mxu0
    %v686 = vadd.f32 %v132, %v685
    %v687 = vpop.f32.mrf.mxu0
    %v688 = vadd.f32 %v132, %v687
    %689 = vmatmul.bf16.gmra.mxu0 %v165
    %v690 = vpop.f32.mrf.mxu0
    %v691 = vadd.f32 %v132, %v690
    %v692 = vpop.f32.mrf.mxu0
    %v693 = vadd.f32 %v132, %v692
    %694 = vmatmul.bf16.gmra.mxu0 %v167
    %v695 = vpop.f32.mrf.mxu0
    %v696 = vadd.f32 %v132, %v695
    %v697 = vpop.f32.mrf.mxu0
    %v698 = vadd.f32 %v132, %v697
    %699 = vdwg.mxu0
    %700 = vmatpush.bf16.xpose.msra.mxu0 %v432
    %701 = vmatpush.bf16.xpose.msra.mxu0 %v430
    %702 = vmatpush.bf16.xpose.msra.mxu0 %v428
    %703 = vmatpush.bf16.xpose.msra.mxu0 %v426
    %704 = vmatpush.bf16.xpose.msra.mxu0 %v424
    %705 = vmatpush.bf16.xpose.msra.mxu0 %v422
    %706 = vmatpush.bf16.xpose.msra.mxu0 %v420
    %707 = vmatpush.bf16.xpose.msra.mxu0 %v418
    %708 = vmatmul.bf16.gmra.mxu0 %v162
    %v709 = vpop.f32.mrf.mxu0
    %v710 = vadd.f32 %v681, %v709
    %v711 = vpop.f32.mrf.mxu0
    %v712 = vadd.f32 %v683, %v711
    %713 = vmatmul.bf16.gmra.mxu0 %v164
    %v714 = vpop.f32.mrf.mxu0
    %v715 = vadd.f32 %v686, %v714
    %v716 = vpop.f32.mrf.mxu0
    %v717 = vadd.f32 %v688, %v716
    %718 = vmatmul.bf16.gmra.mxu0 %v166
    %v719 = vpop.f32.mrf.mxu0
    %v720 = vadd.f32 %v691, %v719
    %v721 = vpop.f32.mrf.mxu0
    %v722 = vadd.f32 %v693, %v721
    %723 = vmatmul.bf16.gmra.mxu0 %v168
    %v724 = vpop.f32.mrf.mxu0
    %v725 = vadd.f32 %v696, %v724
    %v726 = vpop.f32.mrf.mxu0
    %v727 = vadd.f32 %v698, %v726
    %728 = vdwg.mxu0
    %v729 = vmax.f32 %v536, %v594
    %v730 = vmax.f32 %v729, %v652
    %v731 = vmax.f32 %v730, %v710
    %732 = vmax.xlane.f32.xlu0 %v731
    %v733 = vpop.xlane.xlu0 %732
    %v734 = vmax.f32 %v538, %v596
    %v735 = vmax.f32 %v734, %v654
    %v736 = vmax.f32 %v735, %v712
    %737 = vmax.xlane.f32.xlu0 %v736
    %v738 = vpop.xlane.xlu0 %737
    %v739 = vmax.f32 %v541, %v599
    %v740 = vmax.f32 %v739, %v657
    %v741 = vmax.f32 %v740, %v715
    %742 = vmax.xlane.f32.xlu0 %v741
    %v743 = vpop.xlane.xlu0 %742
    %v744 = vmax.f32 %v543, %v601
    %v745 = vmax.f32 %v744, %v659
    %v746 = vmax.f32 %v745, %v717
    %747 = vmax.xlane.f32.xlu0 %v746
    %v748 = vpop.xlane.xlu0 %747
    %v749 = vmax.f32 %v546, %v604
    %v750 = vmax.f32 %v749, %v662
    %v751 = vmax.f32 %v750, %v720
    %752 = vmax.xlane.f32.xlu0 %v751
    %v753 = vpop.xlane.xlu0 %752
    %v754 = vmax.f32 %v548, %v606
    %v755 = vmax.f32 %v754, %v664
    %v756 = vmax.f32 %v755, %v722
    %757 = vmax.xlane.f32.xlu0 %v756
    %v758 = vpop.xlane.xlu0 %757
    %v759 = vmax.f32 %v551, %v609
    %v760 = vmax.f32 %v759, %v667
    %v761 = vmax.f32 %v760, %v725
    %762 = vmax.xlane.f32.xlu0 %v761
    %v763 = vpop.xlane.xlu0 %762
    %v764 = vmax.f32 %v553, %v611
    %v765 = vmax.f32 %v764, %v669
    %v766 = vmax.f32 %v765, %v727
    %767 = vmax.xlane.f32.xlu0 %v766
    %v768 = vpop.xlane.xlu0 %767
    %v769 = vsub.f32 %v536, %v733
    %v770 = vsub.f32 %v594, %v733
    %v771 = vsub.f32 %v652, %v733
    %v772 = vsub.f32 %v710, %v733
    %v773 = vsub.f32 %v538, %v738
    %v774 = vsub.f32 %v596, %v738
    %v775 = vsub.f32 %v654, %v738
    %v776 = vsub.f32 %v712, %v738
    %v777 = vsub.f32 %v541, %v743
    %v778 = vsub.f32 %v599, %v743
    %v779 = vsub.f32 %v657, %v743
    %v780 = vsub.f32 %v715, %v743
    %v781 = vsub.f32 %v543, %v748
    %v782 = vsub.f32 %v601, %v748
    %v783 = vsub.f32 %v659, %v748
    %v784 = vsub.f32 %v717, %v748
    %v785 = vsub.f32 %v546, %v753
    %v786 = vsub.f32 %v604, %v753
    %v787 = vsub.f32 %v662, %v753
    %v788 = vsub.f32 %v720, %v753
    %v789 = vsub.f32 %v548, %v758
    %v790 = vsub.f32 %v606, %v758
    %v791 = vsub.f32 %v664, %v758
    %v792 = vsub.f32 %v722, %v758
    %v793 = vsub.f32 %v551, %v763
    %v794 = vsub.f32 %v609, %v763
    %v795 = vsub.f32 %v667, %v763
    %v796 = vsub.f32 %v725, %v763
    %v797 = vsub.f32 %v553, %v768
    %v798 = vsub.f32 %v611, %v768
    %v799 = vsub.f32 %v669, %v768
    %v800 = vsub.f32 %v727, %v768
    %v801 = vmul.f32 %v769, 1.442695
    %v802 = vpow.pop %v801
    %v803 = vmul.f32 %v770, 1.442695
    %v804 = vpow.pop %v803
    %v805 = vmul.f32 %v771, 1.442695
    %v806 = vpow.pop %v805
    %v807 = vmul.f32 %v772, 1.442695
    %v808 = vpow.pop %v807
    %v809 = vmul.f32 %v773, 1.442695
    %v810 = vpow.pop %v809
    %v811 = vmul.f32 %v774, 1.442695
    %v812 = vpow.pop %v811
    %v813 = vmul.f32 %v775, 1.442695
    %v814 = vpow.pop %v813
    %v815 = vmul.f32 %v776, 1.442695
    %v816 = vpow.pop %v815
    %v817 = vmul.f32 %v777, 1.442695
    %v818 = vpow.pop %v817
    %v819 = vmul.f32 %v778, 1.442695
    %v820 = vpow.pop %v819
    %v821 = vmul.f32 %v779, 1.442695
    %v822 = vpow.pop %v821
    %v823 = vmul.f32 %v780, 1.442695
    %v824 = vpow.pop %v823
    %v825 = vmul.f32 %v781, 1.442695
    %v826 = vpow.pop %v825
    %v827 = vmul.f32 %v782, 1.442695
    %v828 = vpow.pop %v827
    %v829 = vmul.f32 %v783, 1.442695
    %v830 = vpow.pop %v829
    %v831 = vmul.f32 %v784, 1.442695
    %v832 = vpow.pop %v831
    %v833 = vmul.f32 %v785, 1.442695
    %v834 = vpow.pop %v833
    %v835 = vmul.f32 %v786, 1.442695
    %v836 = vpow.pop %v835
    %v837 = vmul.f32 %v787, 1.442695
    %v838 = vpow.pop %v837
    %v839 = vmul.f32 %v788, 1.442695
    %v840 = vpow.pop %v839
    %v841 = vmul.f32 %v789, 1.442695
    %v842 = vpow.pop %v841
    %v843 = vmul.f32 %v790, 1.442695
    %v844 = vpow.pop %v843
    %v845 = vmul.f32 %v791, 1.442695
    %v846 = vpow.pop %v845
    %v847 = vmul.f32 %v792, 1.442695
    %v848 = vpow.pop %v847
    %v849 = vmul.f32 %v793, 1.442695
    %v850 = vpow.pop %v849
    %v851 = vmul.f32 %v794, 1.442695
    %v852 = vpow.pop %v851
    %v853 = vmul.f32 %v795, 1.442695
    %v854 = vpow.pop %v853
    %v855 = vmul.f32 %v796, 1.442695
    %v856 = vpow.pop %v855
    %v857 = vmul.f32 %v797, 1.442695
    %v858 = vpow.pop %v857
    %v859 = vmul.f32 %v798, 1.442695
    %v860 = vpow.pop %v859
    %v861 = vmul.f32 %v799, 1.442695
    %v862 = vpow.pop %v861
    %v863 = vmul.f32 %v800, 1.442695
    %v864 = vpow.pop %v863
    %v865 = vadd.f32 %v802, %v804
    %v866 = vadd.f32 %v865, %v806
    %v867 = vadd.f32 %v866, %v808
    %868 = vadd.xlane.f32.xlu0 %v867
    %v869 = vpop.xlane.xlu0 %868
    %v870 = vadd.f32 %v810, %v812
    %v871 = vadd.f32 %v870, %v814
    %v872 = vadd.f32 %v871, %v816
    %873 = vadd.xlane.f32.xlu0 %v872
    %v874 = vpop.xlane.xlu0 %873
    %v875 = vadd.f32 %v818, %v820
    %v876 = vadd.f32 %v875, %v822
    %v877 = vadd.f32 %v876, %v824
    %878 = vadd.xlane.f32.xlu0 %v877
    %v879 = vpop.xlane.xlu0 %878
    %v880 = vadd.f32 %v826, %v828
    %v881 = vadd.f32 %v880, %v830
    %v882 = vadd.f32 %v881, %v832
    %883 = vadd.xlane.f32.xlu0 %v882
    %v884 = vpop.xlane.xlu0 %883
    %v885 = vadd.f32 %v834, %v836
    %v886 = vadd.f32 %v885, %v838
    %v887 = vadd.f32 %v886, %v840
    %888 = vadd.xlane.f32.xlu0 %v887
    %v889 = vpop.xlane.xlu0 %888
    %v890 = vadd.f32 %v842, %v844
    %v891 = vadd.f32 %v890, %v846
    %v892 = vadd.f32 %v891, %v848
    %893 = vadd.xlane.f32.xlu0 %v892
    %v894 = vpop.xlane.xlu0 %893
    %v895 = vadd.f32 %v850, %v852
    %v896 = vadd.f32 %v895, %v854
    %v897 = vadd.f32 %v896, %v856
    %898 = vadd.xlane.f32.xlu0 %v897
    %v899 = vpop.xlane.xlu0 %898
    %v900 = vadd.f32 %v858, %v860
    %v901 = vadd.f32 %v900, %v862
    %v902 = vadd.f32 %v901, %v864
    %903 = vadd.xlane.f32.xlu0 %v902
    %v904 = vpop.xlane.xlu0 %903
    %v905 = vlog2.pop %v869
    %v906 = vmul.f32 %v905, 0.6931472
    %v907 = vlog2.pop %v874
    %v908 = vmul.f32 %v907, 0.6931472
    %v909 = vlog2.pop %v879
    %v910 = vmul.f32 %v909, 0.6931472
    %v911 = vlog2.pop %v884
    %v912 = vmul.f32 %v911, 0.6931472
    %v913 = vlog2.pop %v889
    %v914 = vmul.f32 %v913, 0.6931472
    %v915 = vlog2.pop %v894
    %v916 = vmul.f32 %v915, 0.6931472
    %v917 = vlog2.pop %v899
    %v918 = vmul.f32 %v917, 0.6931472
    %v919 = vlog2.pop %v904
    %v920 = vmul.f32 %v919, 0.6931472
    %v921 = vadd.f32 %v733, %v906
    %v922 = vadd.f32 %v738, %v908
    %v923 = vadd.f32 %v743, %v910
    %v924 = vadd.f32 %v748, %v912
    %v925 = vadd.f32 %v753, %v914
    %v926 = vadd.f32 %v758, %v916
    %v927 = vadd.f32 %v763, %v918
    %v928 = vadd.f32 %v768, %v920
    %v929 = vlaneseq
    %v930 = vand.u32 %v929, 127
    %v931 = vadd.s32 %v930, 128
    %v932 = vadd.s32 %v930, 256
    %v933 = vadd.s32 %v930, 384
    %934 = vset.pattern.permute.xlu0 0
    %935 = vperm.xlu0 %934, %v120
    %v936 = vpop.permute.xlu0 %935
    %937 = vset.pattern.permute.xlu0 0
    %938 = vperm.xlu0 %937, %v121
    %v939 = vpop.permute.xlu0 %938
    %940 = vset.pattern.permute.xlu0 0
    %941 = vperm.xlu0 %940, %v122
    %v942 = vpop.permute.xlu0 %941
    %943 = vset.pattern.permute.xlu0 0
    %944 = vperm.xlu0 %943, %v123
    %v945 = vpop.permute.xlu0 %944
    %946 = vset.pattern.permute.xlu0 0
    %947 = vperm.xlu0 %946, %v124
    %v948 = vpop.permute.xlu0 %947
    %949 = vset.pattern.permute.xlu0 0
    %950 = vperm.xlu0 %949, %v125
    %v951 = vpop.permute.xlu0 %950
    %952 = vset.pattern.permute.xlu0 0
    %953 = vperm.xlu0 %952, %v126
    %v954 = vpop.permute.xlu0 %953
    %955 = vset.pattern.permute.xlu0 0
    %956 = vperm.xlu0 %955, %v127
    %v957 = vpop.permute.xlu0 %956
    %vm958 = vcmp.eq.s32.totalorder %v930, %v936
    %vm959 = vcmp.eq.s32.totalorder %v931, %v936
    %vm960 = vcmp.eq.s32.totalorder %v932, %v936
    %vm961 = vcmp.eq.s32.totalorder %v933, %v936
    %vm962 = vcmp.eq.s32.totalorder %v930, %v939
    %vm963 = vcmp.eq.s32.totalorder %v931, %v939
    %vm964 = vcmp.eq.s32.totalorder %v932, %v939
    %vm965 = vcmp.eq.s32.totalorder %v933, %v939
    %vm966 = vcmp.eq.s32.totalorder %v930, %v942
    %vm967 = vcmp.eq.s32.totalorder %v931, %v942
    %vm968 = vcmp.eq.s32.totalorder %v932, %v942
    %vm969 = vcmp.eq.s32.totalorder %v933, %v942
    %vm970 = vcmp.eq.s32.totalorder %v930, %v945
    %vm971 = vcmp.eq.s32.totalorder %v931, %v945
    %vm972 = vcmp.eq.s32.totalorder %v932, %v945
    %vm973 = vcmp.eq.s32.totalorder %v933, %v945
    %vm974 = vcmp.eq.s32.totalorder %v930, %v948
    %vm975 = vcmp.eq.s32.totalorder %v931, %v948
    %vm976 = vcmp.eq.s32.totalorder %v932, %v948
    %vm977 = vcmp.eq.s32.totalorder %v933, %v948
    %vm978 = vcmp.eq.s32.totalorder %v930, %v951
    %vm979 = vcmp.eq.s32.totalorder %v931, %v951
    %vm980 = vcmp.eq.s32.totalorder %v932, %v951
    %vm981 = vcmp.eq.s32.totalorder %v933, %v951
    %vm982 = vcmp.eq.s32.totalorder %v930, %v954
    %vm983 = vcmp.eq.s32.totalorder %v931, %v954
    %vm984 = vcmp.eq.s32.totalorder %v932, %v954
    %vm985 = vcmp.eq.s32.totalorder %v933, %v954
    %vm986 = vcmp.eq.s32.totalorder %v930, %v957
    %vm987 = vcmp.eq.s32.totalorder %v931, %v957
    %vm988 = vcmp.eq.s32.totalorder %v932, %v957
    %vm989 = vcmp.eq.s32.totalorder %v933, %v957
    %v990 = vsel %vm958, %v536, 0.0
    %v991 = vsel %vm959, %v594, 0.0
    %v992 = vsel %vm960, %v652, 0.0
    %v993 = vsel %vm961, %v710, 0.0
    %v994 = vsel %vm962, %v538, 0.0
    %v995 = vsel %vm963, %v596, 0.0
    %v996 = vsel %vm964, %v654, 0.0
    %v997 = vsel %vm965, %v712, 0.0
    %v998 = vsel %vm966, %v541, 0.0
    %v999 = vsel %vm967, %v599, 0.0
    %v1000 = vsel %vm968, %v657, 0.0
    %v1001 = vsel %vm969, %v715, 0.0
    %v1002 = vsel %vm970, %v543, 0.0
    %v1003 = vsel %vm971, %v601, 0.0
    %v1004 = vsel %vm972, %v659, 0.0
    %v1005 = vsel %vm973, %v717, 0.0
    %v1006 = vsel %vm974, %v546, 0.0
    %v1007 = vsel %vm975, %v604, 0.0
    %v1008 = vsel %vm976, %v662, 0.0
    %v1009 = vsel %vm977, %v720, 0.0
    %v1010 = vsel %vm978, %v548, 0.0
    %v1011 = vsel %vm979, %v606, 0.0
    %v1012 = vsel %vm980, %v664, 0.0
    %v1013 = vsel %vm981, %v722, 0.0
    %v1014 = vsel %vm982, %v551, 0.0
    %v1015 = vsel %vm983, %v609, 0.0
    %v1016 = vsel %vm984, %v667, 0.0
    %v1017 = vsel %vm985, %v725, 0.0
    %v1018 = vsel %vm986, %v553, 0.0
    %v1019 = vsel %vm987, %v611, 0.0
    %v1020 = vsel %vm988, %v669, 0.0
    %v1021 = vsel %vm989, %v727, 0.0
    %v1022 = vadd.f32 %v990, %v991
    %v1023 = vadd.f32 %v1022, %v992
    %v1024 = vadd.f32 %v1023, %v993
    %1025 = vadd.xlane.f32.xlu0 %v1024
    %v1026 = vpop.xlane.xlu0 %1025
    %v1027 = vadd.f32 %v994, %v995
    %v1028 = vadd.f32 %v1027, %v996
    %v1029 = vadd.f32 %v1028, %v997
    %1030 = vadd.xlane.f32.xlu0 %v1029
    %v1031 = vpop.xlane.xlu0 %1030
    %v1032 = vadd.f32 %v998, %v999
    %v1033 = vadd.f32 %v1032, %v1000
    %v1034 = vadd.f32 %v1033, %v1001
    %1035 = vadd.xlane.f32.xlu0 %v1034
    %v1036 = vpop.xlane.xlu0 %1035
    %v1037 = vadd.f32 %v1002, %v1003
    %v1038 = vadd.f32 %v1037, %v1004
    %v1039 = vadd.f32 %v1038, %v1005
    %1040 = vadd.xlane.f32.xlu0 %v1039
    %v1041 = vpop.xlane.xlu0 %1040
    %v1042 = vadd.f32 %v1006, %v1007
    %v1043 = vadd.f32 %v1042, %v1008
    %v1044 = vadd.f32 %v1043, %v1009
    %1045 = vadd.xlane.f32.xlu0 %v1044
    %v1046 = vpop.xlane.xlu0 %1045
    %v1047 = vadd.f32 %v1010, %v1011
    %v1048 = vadd.f32 %v1047, %v1012
    %v1049 = vadd.f32 %v1048, %v1013
    %1050 = vadd.xlane.f32.xlu0 %v1049
    %v1051 = vpop.xlane.xlu0 %1050
    %v1052 = vadd.f32 %v1014, %v1015
    %v1053 = vadd.f32 %v1052, %v1016
    %v1054 = vadd.f32 %v1053, %v1017
    %1055 = vadd.xlane.f32.xlu0 %v1054
    %v1056 = vpop.xlane.xlu0 %1055
    %v1057 = vadd.f32 %v1018, %v1019
    %v1058 = vadd.f32 %v1057, %v1020
    %v1059 = vadd.f32 %v1058, %v1021
    %1060 = vadd.xlane.f32.xlu0 %v1059
    %v1061 = vpop.xlane.xlu0 %1060
    %v1062 = vadd.f32 %v536, %v594
    %v1063 = vadd.f32 %v1062, %v652
    %v1064 = vadd.f32 %v1063, %v710
    %1065 = vadd.xlane.f32.xlu0 %v1064
    %v1066 = vpop.xlane.xlu0 %1065
    %v1067 = vadd.f32 %v538, %v596
    %v1068 = vadd.f32 %v1067, %v654
    %v1069 = vadd.f32 %v1068, %v712
    %1070 = vadd.xlane.f32.xlu0 %v1069
    %v1071 = vpop.xlane.xlu0 %1070
    %v1072 = vadd.f32 %v541, %v599
    %v1073 = vadd.f32 %v1072, %v657
    %v1074 = vadd.f32 %v1073, %v715
    %1075 = vadd.xlane.f32.xlu0 %v1074
    %v1076 = vpop.xlane.xlu0 %1075
    %v1077 = vadd.f32 %v543, %v601
    %v1078 = vadd.f32 %v1077, %v659
    %v1079 = vadd.f32 %v1078, %v717
    %1080 = vadd.xlane.f32.xlu0 %v1079
    %v1081 = vpop.xlane.xlu0 %1080
    %v1082 = vadd.f32 %v546, %v604
    %v1083 = vadd.f32 %v1082, %v662
    %v1084 = vadd.f32 %v1083, %v720
    %1085 = vadd.xlane.f32.xlu0 %v1084
    %v1086 = vpop.xlane.xlu0 %1085
    %v1087 = vadd.f32 %v548, %v606
    %v1088 = vadd.f32 %v1087, %v664
    %v1089 = vadd.f32 %v1088, %v722
    %1090 = vadd.xlane.f32.xlu0 %v1089
    %v1091 = vpop.xlane.xlu0 %1090
    %v1092 = vadd.f32 %v551, %v609
    %v1093 = vadd.f32 %v1092, %v667
    %v1094 = vadd.f32 %v1093, %v725
    %1095 = vadd.xlane.f32.xlu0 %v1094
    %v1096 = vpop.xlane.xlu0 %1095
    %v1097 = vadd.f32 %v553, %v611
    %v1098 = vadd.f32 %v1097, %v669
    %v1099 = vadd.f32 %v1098, %v727
    %1100 = vadd.xlane.f32.xlu0 %v1099
    %v1101 = vpop.xlane.xlu0 %1100
    %v1102 = vmul.f32 %v1026, 0.9
    %v1103 = vmul.f32 %v1031, 0.9
    %v1104 = vmul.f32 %v1036, 0.9
    %v1105 = vmul.f32 %v1041, 0.9
    %v1106 = vmul.f32 %v1046, 0.9
    %v1107 = vmul.f32 %v1051, 0.9
    %v1108 = vmul.f32 %v1056, 0.9
    %v1109 = vmul.f32 %v1061, 0.9
    %v1110 = vsub.f32 %v921, %v1102
    %v1111 = vsub.f32 %v922, %v1103
    %v1112 = vsub.f32 %v923, %v1104
    %v1113 = vsub.f32 %v924, %v1105
    %v1114 = vsub.f32 %v925, %v1106
    %v1115 = vsub.f32 %v926, %v1107
    %v1116 = vsub.f32 %v927, %v1108
    %v1117 = vsub.f32 %v928, %v1109
    %v1118 = vmul.f32 %v1066, 0.0001953125
    %v1119 = vmul.f32 %v1071, 0.0001953125
    %v1120 = vmul.f32 %v1076, 0.0001953125
    %v1121 = vmul.f32 %v1081, 0.0001953125
    %v1122 = vmul.f32 %v1086, 0.0001953125
    %v1123 = vmul.f32 %v1091, 0.0001953125
    %v1124 = vmul.f32 %v1096, 0.0001953125
    %v1125 = vmul.f32 %v1101, 0.0001953125
    %v1126 = vsub.f32 %v1110, %v1118
    %v1127 = vsub.f32 %v1111, %v1119
    %v1128 = vsub.f32 %v1112, %v1120
    %v1129 = vsub.f32 %v1113, %v1121
    %v1130 = vsub.f32 %v1114, %v1122
    %v1131 = vsub.f32 %v1115, %v1123
    %v1132 = vsub.f32 %v1116, %v1124
    %v1133 = vsub.f32 %v1117, %v1125
    %vm1134 = vcmask 7168
    %1135 = vst.msk [vmem:[%s4] sm:$0xff] %vm1134, %v1126
    %1136 = vst.msk [vmem:[%s4 + $0x8] sm:$0xff] %vm1134, %v1127
    %1137 = vst.msk [vmem:[%s4 + $0x10] sm:$0xff] %vm1134, %v1128
    %1138 = vst.msk [vmem:[%s4 + $0x18] sm:$0xff] %vm1134, %v1129
    %1139 = vst.msk [vmem:[%s4 + $0x20] sm:$0xff] %vm1134, %v1130
    %1140 = vst.msk [vmem:[%s4 + $0x28] sm:$0xff] %vm1134, %v1131
    %1141 = vst.msk [vmem:[%s4 + $0x30] sm:$0xff] %vm1134, %v1132
    %1142 = vst.msk [vmem:[%s4 + $0x38] sm:$0xff] %vm1134, %v1133
    // Predicated region
    $region26: #{tpu_custom_call.1} parent=1 // pred_check
      _
    $region27: #{tpu_custom_call.1} parent=1 // pred_check_branch
      %1144 = sbr.rel (0) target = $region29
    $region28: #{tpu_custom_call.1} parent=1 // pred_region
      _
    $region29: #{tpu_custom_call.1} parent=1 // pred_fallthru
      _
    // Predicated region
    $region30: #{tpu_custom_call.1} parent=1 // pred_check
      _
    $region31: #{tpu_custom_call.1} parent=1 // pred_check_branch
      %1146 = sbr.rel (0) target = $region33
    $region32: #{tpu_custom_call.1} parent=1 // pred_region
      _
    $region33: #{tpu_custom_call.1} parent=1 // pred_fallthru
      _
    %1147 = vsyncpa [#allocation3], 1
    %1148 = vsyncpa [#allocation5], 1

</llo_original>
